<compile_context>
chip_gen: v7x
topology: tpu7x:2x2x1
jax: 0.10.0
libtpu: 0.0.40
codegen_flags: <defaults>
</compile_context>

<pallas_src>
import jax
import jax.numpy as jnp
from jax.experimental import pallas as pl
from jax.experimental.pallas import tpu as pltpu


def _round_up(a: int, b: int) -> int:
    return (a + b - 1) // b * b


def tts_adapter_mlp_kernel(x_ref, wg_ref, wu_ref, wd_ref, o_ref):
    # x_ref:  (tm, Hp)   bf16 token tile
    # wg_ref: (Hp, Ip)   bf16 gate projection weight (resident across grid)
    # wu_ref: (Hp, Ip)   bf16 up   projection weight (resident across grid)
    # wd_ref: (Ip, Hp)   bf16 down projection weight (resident across grid)
    # o_ref:  (tm, Hp)   f32 output tile
    x = x_ref[...]
    # Two lane-aligned MXU dots (no non-128-aligned slicing of a merged result).
    gate = jnp.dot(x, wg_ref[...], preferred_element_type=jnp.float32)
    up = jnp.dot(x, wu_ref[...], preferred_element_type=jnp.float32)
    # SiluAndMul in f32 on the VPU/EUP; cast to bf16 only for the second MXU op.
    act = (gate * jax.nn.sigmoid(gate) * up).astype(wd_ref.dtype)
    out = jnp.dot(act, wd_ref[...], preferred_element_type=jnp.float32)
    o_ref[...] = out.astype(o_ref.dtype)


def tts_adapter_mlp(x, w_gate_up, w_down):
    """x: (T, H); w_gate_up: (H, 2I); w_down: (I, H)  ->  (T, H) in x.dtype."""
    T, H = x.shape
    I2 = w_gate_up.shape[1]
    I = I2 // 2
    assert w_gate_up.shape == (H, I2)
    assert w_down.shape == (I, H)

    # Split the merged gate_up weight (wrapper side, free for the kernel).
    w_gate = w_gate_up[:, :I]
    w_up = w_gate_up[:, I:]

    # Lane/sublane padding: last dims to 128, token dim to a multiple of 16
    # (bf16 sublane packing), token tile up to 256 rows.
    H_pad = _round_up(H, 128)
    I_pad = _round_up(I, 128)
    T_pad = _round_up(max(T, 1), 16)
    tm = min(T_pad, 256)
    T_pad = _round_up(T_pad, tm)
    grid = (T_pad // tm,)

    cdtype = jnp.bfloat16
    x_p = jnp.zeros((T_pad, H_pad), cdtype).at[:T, :H].set(x.astype(cdtype))
    wg_p = jnp.zeros((H_pad, I_pad), cdtype).at[:H, :I].set(w_gate.astype(cdtype))
    wu_p = jnp.zeros((H_pad, I_pad), cdtype).at[:H, :I].set(w_up.astype(cdtype))
    wd_p = jnp.zeros((I_pad, H_pad), cdtype).at[:I, :H].set(w_down.astype(cdtype))

    out_dtype = x.dtype
    out_bytes = T_pad * H_pad * jnp.dtype(out_dtype).itemsize
    cost = pl.CostEstimate(
        flops=6 * T_pad * H_pad * I_pad,               # 3 matmuls (2 flops/MAC)
        transcendentals=T_pad * I_pad,                 # sigmoid
        bytes_accessed=x_p.nbytes + wg_p.nbytes + wu_p.nbytes + wd_p.nbytes
        + out_bytes,
    )

    # VMEM budget (Pallas double-buffers every operand). Only raise the scoped
    # limit when the resident-weight plan actually needs it; leave headroom.
    vmem_needed = 2 * (
        tm * H_pad * jnp.dtype(cdtype).itemsize        # x tile
        + tm * H_pad * jnp.dtype(out_dtype).itemsize   # out tile
        + wg_p.nbytes + wu_p.nbytes + wd_p.nbytes      # resident weights
    )
    vmem_limit = int(vmem_needed * 1.5) if vmem_needed > (12 << 20) else None

    out_p = pl.pallas_call(
        tts_adapter_mlp_kernel,
        out_shape=jax.ShapeDtypeStruct((T_pad, H_pad), out_dtype),
        grid_spec=pltpu.PrefetchScalarGridSpec(
            num_scalar_prefetch=0,
            grid=grid,
            in_specs=[
                pl.BlockSpec((tm, H_pad), lambda i: (i, 0)),     # x token tile
                pl.BlockSpec((H_pad, I_pad), lambda i: (0, 0)),  # gate weight
                pl.BlockSpec((H_pad, I_pad), lambda i: (0, 0)),  # up weight
                pl.BlockSpec((I_pad, H_pad), lambda i: (0, 0)),  # down weight
            ],
            out_specs=pl.BlockSpec((tm, H_pad), lambda i: (i, 0)),
        ),
        compiler_params=pltpu.CompilerParams(
            dimension_semantics=("parallel",),
            vmem_limit_bytes=vmem_limit,
        ),
        cost_estimate=cost,
    )(x_p, wg_p, wu_p, wd_p)

    return out_p[:T, :H]


def reference_mlp(x, w_gate_up, w_down):
    gu = x @ w_gate_up
    I = w_down.shape[0]
    gate, up = gu[:, :I], gu[:, I:]
    return (jax.nn.silu(gate) * up) @ w_down


if __name__ == "__main__":
    # Small config consistent with the module:
    # tts_adapter_hidden_size=32, tts_adapter_intermediate_size=64, 16 tokens.
    hidden_size = 32
    intermediate_size = 64
    num_tokens = 16

    key = jax.random.PRNGKey(0)
    k_x, k_gu, k_d = jax.random.split(key, 3)

    x = jax.random.normal(k_x, (num_tokens, hidden_size), dtype=jnp.float32)
    # Deterministic synthetic weights (stored as (in, out) for x @ W).
    w_gate_up = jax.random.normal(
        k_gu, (hidden_size, 2 * intermediate_size), dtype=jnp.float32) * 0.05
    w_down = jax.random.normal(
        k_d, (intermediate_size, hidden_size), dtype=jnp.float32) * 0.05

    out = tts_adapter_mlp(x, w_gate_up, w_down)
    out = jax.block_until_ready(out)

    ref = reference_mlp(x, w_gate_up, w_down)
    assert out.shape == (num_tokens, hidden_size)
    max_err = jnp.max(jnp.abs(out - ref))
    # bf16 MXU operands with f32 accumulation -> loosen the f32 tolerance.
    assert jnp.allclose(out, ref, atol=2e-2, rtol=2e-2), (
        f"max abs err {max_err}")

    print("KERNEL_OK")
</pallas_src>

<mosaic_0001>
module attributes {stable_mosaic.version = 11 : i64} {
  func.func @tts_adapter_mlp_kernel(%arg0: i32, %arg1: memref<16x128xbf16, #tpu.memory_space<vmem>>, %arg2: memref<128x128xbf16, #tpu.memory_space<vmem>>, %arg3: memref<128x128xbf16, #tpu.memory_space<vmem>>, %arg4: memref<128x128xbf16, #tpu.memory_space<vmem>>, %arg5: memref<16x128xf32, #tpu.memory_space<vmem>>) attributes {dimension_semantics = [#tpu.dimension_semantics<parallel>], iteration_bounds = array<i64: 1>, scalar_prefetch = 0 : i64, scratch_operands = 0 : i64, tpu.core_type = #tpu.core_type<tc>, window_params = [{transform_indices = @transform_0, window_bounds = array<i64: 16, 128>}, {pipeline_mode = #tpu.pipeline_mode<synchronous>, transform_indices = @transform_1, window_bounds = array<i64: 128, 128>}, {pipeline_mode = #tpu.pipeline_mode<synchronous>, transform_indices = @transform_2, window_bounds = array<i64: 128, 128>}, {pipeline_mode = #tpu.pipeline_mode<synchronous>, transform_indices = @transform_3, window_bounds = array<i64: 128, 128>}, {transform_indices = @transform_4, window_bounds = array<i64: 16, 128>}]} {
    %c0 = arith.constant 0 : index
    %c0_0 = arith.constant 0 : index
    %0 = vector.load %arg1[%c0, %c0_0] : memref<16x128xbf16, #tpu.memory_space<vmem>>, vector<16x128xbf16>
    %c0_1 = arith.constant 0 : index
    %c0_2 = arith.constant 0 : index
    %1 = vector.load %arg2[%c0_1, %c0_2] : memref<128x128xbf16, #tpu.memory_space<vmem>>, vector<128x128xbf16>
    %cst = arith.constant dense<0.000000e+00> : vector<16x128xf32>
    %2 = tpu.matmul %0, %1, %cst {dimension_numbers = #tpu.dot_dimension_numbers<[1], [0], [0], [1], [0, 0, 1, 1], [], []>} : vector<16x128xbf16>, vector<128x128xbf16>, vector<16x128xf32> -> vector<16x128xf32>
    %c0_3 = arith.constant 0 : index
    %c0_4 = arith.constant 0 : index
    %3 = vector.load %arg3[%c0_3, %c0_4] : memref<128x128xbf16, #tpu.memory_space<vmem>>, vector<128x128xbf16>
    %cst_5 = arith.constant dense<0.000000e+00> : vector<16x128xf32>
    %4 = tpu.matmul %0, %3, %cst_5 {dimension_numbers = #tpu.dot_dimension_numbers<[1], [0], [0], [1], [0, 0, 1, 1], [], []>} : vector<16x128xbf16>, vector<128x128xbf16>, vector<16x128xf32> -> vector<16x128xf32>
    %5 = arith.negf %2 : vector<16x128xf32>
    %6 = math.exp %5 : vector<16x128xf32>
    %cst_6 = arith.constant 1.000000e+00 : f32
    %7 = vector.broadcast %cst_6 : f32 to vector<16x128xf32>
    %8 = arith.addf %7, %6 : vector<16x128xf32>
    %9 = arith.divf %7, %8 : vector<16x128xf32>
    %10 = arith.mulf %2, %9 : vector<16x128xf32>
    %11 = arith.mulf %10, %4 : vector<16x128xf32>
    %12 = arith.truncf %11 : vector<16x128xf32> to vector<16x128xbf16>
    %c0_7 = arith.constant 0 : index
    %c0_8 = arith.constant 0 : index
    %13 = vector.load %arg4[%c0_7, %c0_8] : memref<128x128xbf16, #tpu.memory_space<vmem>>, vector<128x128xbf16>
    %cst_9 = arith.constant dense<0.000000e+00> : vector<16x128xf32>
    %14 = tpu.matmul %12, %13, %cst_9 {dimension_numbers = #tpu.dot_dimension_numbers<[1], [0], [0], [1], [0, 0, 1, 1], [], []>} : vector<16x128xbf16>, vector<128x128xbf16>, vector<16x128xf32> -> vector<16x128xf32>
    %c0_10 = arith.constant 0 : index
    %c0_11 = arith.constant 0 : index
    %15 = vector.load %arg5[%c0_10, %c0_11] : memref<16x128xf32, #tpu.memory_space<vmem>>, vector<16x128xf32>
    tpu.vector_store %arg5[%c0_10, %c0_11], %14 {strides = array<i32>} : memref<16x128xf32, #tpu.memory_space<vmem>>, vector<16x128xf32>,
    return
  }
  func.func @transform_0(%arg0: i32) -> (i32, i32) {
    %c0_i32 = arith.constant 0 : i32
    %c0_i32_0 = arith.constant 0 : i32
    return %arg0, %c0_i32 : i32, i32
  }
  func.func @transform_1(%arg0: i32) -> (i32, i32) {
    %c0_i32 = arith.constant 0 : i32
    %c0_i32_0 = arith.constant 0 : i32
    %c0_i32_1 = arith.constant 0 : i32
    return %c0_i32, %c0_i32_0 : i32, i32
  }
  func.func @transform_2(%arg0: i32) -> (i32, i32) {
    %c0_i32 = arith.constant 0 : i32
    %c0_i32_0 = arith.constant 0 : i32
    %c0_i32_1 = arith.constant 0 : i32
    return %c0_i32, %c0_i32_0 : i32, i32
  }
  func.func @transform_3(%arg0: i32) -> (i32, i32) {
    %c0_i32 = arith.constant 0 : i32
    %c0_i32_0 = arith.constant 0 : i32
    %c0_i32_1 = arith.constant 0 : i32
    return %c0_i32, %c0_i32_0 : i32, i32
  }
  func.func @transform_4(%arg0: i32) -> (i32, i32) {
    %c0_i32 = arith.constant 0 : i32
    %c0_i32_0 = arith.constant 0 : i32
    return %arg0, %c0_i32 : i32, i32
  }
}

</mosaic_0001>

<llo_original>
// kernel: tpu_custom_call.1
$region0: #{tpu_custom_call.1}
  #allocation0 [shape = 'u32[]', space=smem, size = 0x4, offset = 0x4, fixed_abs, tag = 'smem constant byte address 0x4 - core index']
  #allocation1 [shape = 'u32[144,128]{1,0:T(1,128)}', space=vmem, size = 0x12000, scoped, tag = 'internal scratch']
  %s0 = inlined_call_operand.hbm [shape: bf16[16,128], index: 0, kind: input, shape index: {}]
  %s1 = inlined_call_operand.hbm [shape: bf16[128,128], index: 1, kind: input, shape index: {}]
  %s2 = inlined_call_operand.hbm [shape: bf16[128,128], index: 2, kind: input, shape index: {}]
  %s3 = inlined_call_operand.hbm [shape: bf16[128,128], index: 3, kind: input, shape index: {}]
  %s4 = inlined_call_operand.hbm [shape: f32[16,128], index: 4, kind: output, shape index: {}]
  %s5 = sld [smem:[#allocation0]]
  $region42: #{tpu_custom_call.1} parent=0
    _
  %s7 = ssub.s32 1, %s5
  %s8 = scalar_select 0, %s7, %s5
  $region1: #{tpu_custom_call.1} parent=0
    #allocation2 [shape = 'u8[4096]{0}', space=vmem, size = 0x1000, scoped, tag = 'input window, operand 0, single buffered']
    #allocation3 [shape = 's32[1]{0}', space=sflag, size = 0x4, scoped, tag = 'scoped memory for tpu_custom_call.1']
    #allocation4 [shape = 's32[1]{0}', space=sflag, size = 0x4, scoped, tag = 'scoped memory for tpu_custom_call.1']
    #allocation5 [shape = 'u8[32768]{0}', space=vmem, size = 0x8000, scoped, tag = 'input window, operand 1, single buffered']
    #allocation6 [shape = 's32[1]{0}', space=sflag, size = 0x4, scoped, tag = 'scoped memory for tpu_custom_call.1']
    #allocation7 [shape = 'u8[32768]{0}', space=vmem, size = 0x8000, scoped, tag = 'input window, operand 2, single buffered']
    #allocation8 [shape = 'u8[32768]{0}', space=vmem, size = 0x8000, scoped, tag = 'input window, operand 3, single buffered']
    #allocation9 [shape = 's32[1]{0}', space=sflag, size = 0x4, scoped, tag = 'scoped memory for tpu_custom_call.1']
    #allocation10 [shape = 'u8[8192]{0}', space=vmem, size = 0x2000, scoped, tag = 'output window, operand 0, single buffered']
    %9 = vsyncpa [#allocation3], 0
    %10 = vsyncpa [#allocation6], 0
    %11 = vsyncpa [#allocation9], 0
    %12 = vsyncpa [#allocation4], 0
    // Predicated region
    $region2: #{tpu_custom_call.1} parent=1 // pred_check
      _
    $region3: #{tpu_custom_call.1} parent=1 // pred_check_branch
      %14 = sbr.rel (0) target = $region5
    $region4: #{tpu_custom_call.1} parent=1 // pred_region
      %s16 = ssub.s32 128, 128
      %17 = vsyncadd [#allocation3], %s16
      %s18 = sshll.u32 [#allocation2], 4
      %s19 = int_to_ptr.vmem [resolvable:$true] %s18
      %24 = dma.hbm_to_vmem [thread:$0]  %s0, 128, %s19, [#allocation3], 64, 64, 4
    $region5: #{tpu_custom_call.1} parent=1 // pred_fallthru
      _
    // Predicated region
    $region6: #{tpu_custom_call.1} parent=1 // pred_check
      _
    $region7: #{tpu_custom_call.1} parent=1 // pred_check_branch
      %26 = sbr.rel (0) target = $region9
    $region8: #{tpu_custom_call.1} parent=1 // pred_region
      %s28 = ssub.s32 1024, 1024
      %29 = vsyncadd [#allocation6], %s28
      %s30 = sshll.u32 [#allocation5], 4
      %s31 = int_to_ptr.vmem [resolvable:$true] %s30
      %36 = dma.hbm_to_vmem [thread:$0]  %s1, 1024, %s31, [#allocation6], 64, 64, 4
    $region9: #{tpu_custom_call.1} parent=1 // pred_fallthru
      _
    // Predicated region
    $region10: #{tpu_custom_call.1} parent=1 // pred_check
      _
    $region11: #{tpu_custom_call.1} parent=1 // pred_check_branch
      %38 = sbr.rel (0) target = $region13
    $region12: #{tpu_custom_call.1} parent=1 // pred_region
      %s40 = ssub.s32 1024, 1024
      %41 = vsyncadd [#allocation6], %s40
      %s42 = sshll.u32 [#allocation7], 4
      %s43 = int_to_ptr.vmem [resolvable:$true] %s42
      %48 = dma.hbm_to_vmem [thread:$0]  %s2, 1024, %s43, [#allocation6], 64, 64, 4
    $region13: #{tpu_custom_call.1} parent=1 // pred_fallthru
      _
    // Predicated region
    $region14: #{tpu_custom_call.1} parent=1 // pred_check
      _
    $region15: #{tpu_custom_call.1} parent=1 // pred_check_branch
      %50 = sbr.rel (0) target = $region17
    $region16: #{tpu_custom_call.1} parent=1 // pred_region
      %s52 = ssub.s32 1024, 1024
      %53 = vsyncadd [#allocation9], %s52
      %s54 = sshll.u32 [#allocation8], 4
      %s55 = int_to_ptr.vmem [resolvable:$true] %s54
      %60 = dma.hbm_to_vmem [thread:$0]  %s3, 1024, %s55, [#allocation9], 64, 64, 4
    $region17: #{tpu_custom_call.1} parent=1 // pred_fallthru
      _
    // Predicated region
    $region18: #{tpu_custom_call.1} parent=1 // pred_check
      _
    $region19: #{tpu_custom_call.1} parent=1 // pred_check_branch
      %62 = sbr.rel (0) target = $region21
    $region20: #{tpu_custom_call.1} parent=1 // pred_region
      %63 = dma.done [#allocation3], 128
    $region21: #{tpu_custom_call.1} parent=1 // pred_fallthru
      _
    // Predicated region
    $region22: #{tpu_custom_call.1} parent=1 // pred_check
      _
    $region23: #{tpu_custom_call.1} parent=1 // pred_check_branch
      %65 = sbr.rel (0) target = $region25
    $region24: #{tpu_custom_call.1} parent=1 // pred_region
      %66 = dma.done [#allocation6], 1024
    $region25: #{tpu_custom_call.1} parent=1 // pred_fallthru
      _
    // Predicated region
    $region26: #{tpu_custom_call.1} parent=1 // pred_check
      _
    $region27: #{tpu_custom_call.1} parent=1 // pred_check_branch
      %68 = sbr.rel (0) target = $region29
    $region28: #{tpu_custom_call.1} parent=1 // pred_region
      %69 = dma.done [#allocation6], 1024
    $region29: #{tpu_custom_call.1} parent=1 // pred_fallthru
      _
    // Predicated region
    $region30: #{tpu_custom_call.1} parent=1 // pred_check
      _
    $region31: #{tpu_custom_call.1} parent=1 // pred_check_branch
      %71 = sbr.rel (0) target = $region33
    $region32: #{tpu_custom_call.1} parent=1 // pred_region
      %72 = dma.done [#allocation9], 1024
    $region33: #{tpu_custom_call.1} parent=1 // pred_fallthru
      _
    %v74 = vld [vmem:[#allocation2] sm:$0xf]
    %v75 = vld [vmem:[#allocation2 + $0x4] sm:$0xf]
    %v76 = vld [vmem:[#allocation5] sm:$0xf]
    %v77 = vld [vmem:[#allocation5 + $0x4] sm:$0xf]
    %v78 = vld [vmem:[#allocation5 + $0x8] sm:$0xf]
    %v79 = vld [vmem:[#allocation5 + $0xc] sm:$0xf]
    %v80 = vld [vmem:[#allocation5 + $0x10] sm:$0xf]
    %v81 = vld [vmem:[#allocation5 + $0x14] sm:$0xf]
    %v82 = vld [vmem:[#allocation5 + $0x18] sm:$0xf]
    %v83 = vld [vmem:[#allocation5 + $0x1c] sm:$0xf]
    %v84 = vld [vmem:[#allocation5 + $0x20] sm:$0xf]
    %v85 = vld [vmem:[#allocation5 + $0x24] sm:$0xf]
    %v86 = vld [vmem:[#allocation5 + $0x28] sm:$0xf]
    %v87 = vld [vmem:[#allocation5 + $0x2c] sm:$0xf]
    %v88 = vld [vmem:[#allocation5 + $0x30] sm:$0xf]
    %v89 = vld [vmem:[#allocation5 + $0x34] sm:$0xf]
    %v90 = vld [vmem:[#allocation5 + $0x38] sm:$0xf]
    %v91 = vld [vmem:[#allocation5 + $0x3c] sm:$0xf]
    %v94 = vunpack.c.l.b16 %v74
    %v95 = vunpack.c.l.b16 %v75
    %v96 = vpack.c.b16 %v95, %v94
    %v114 = vunpack.c.l.b16 %v76
    %v115 = vunpack.c.l.b16 %v77
    %v116 = vunpack.c.l.b16 %v78
    %v117 = vunpack.c.l.b16 %v79
    %v118 = vunpack.c.l.b16 %v80
    %v119 = vunpack.c.l.b16 %v81
    %v120 = vunpack.c.l.b16 %v82
    %v121 = vunpack.c.l.b16 %v83
    %v122 = vunpack.c.l.b16 %v84
    %v123 = vunpack.c.l.b16 %v85
    %v124 = vunpack.c.l.b16 %v86
    %v125 = vunpack.c.l.b16 %v87
    %v126 = vunpack.c.l.b16 %v88
    %v127 = vunpack.c.l.b16 %v89
    %v128 = vunpack.c.l.b16 %v90
    %v129 = vunpack.c.l.b16 %v91
    %v130 = vpack.c.b16 %v115, %v114
    %v131 = vpack.c.b16 %v117, %v116
    %v132 = vpack.c.b16 %v119, %v118
    %v133 = vpack.c.b16 %v121, %v120
    %v134 = vpack.c.b16 %v123, %v122
    %v135 = vpack.c.b16 %v125, %v124
    %v136 = vpack.c.b16 %v127, %v126
    %v137 = vpack.c.b16 %v129, %v128
    %146 = vmatprep.subr.bf16.mxu0 0
    %147 = vmatpush1.bf16.msra.mxu0 %v130
    %148 = vmatprep.subr.bf16.mxu0 0
    %149 = vmatpush1.bf16.msra.mxu0 %v131
    %150 = vmatprep.subr.bf16.mxu0 0
    %151 = vmatpush1.bf16.msra.mxu0 %v132
    %152 = vmatprep.subr.bf16.mxu0 0
    %153 = vmatpush1.bf16.msra.mxu0 %v133
    %154 = vmatprep.subr.bf16.mxu0 0
    %155 = vmatpush1.bf16.msra.mxu0 %v134
    %156 = vmatprep.subr.bf16.mxu0 0
    %157 = vmatpush1.bf16.msra.mxu0 %v135
    %158 = vmatprep.subr.bf16.mxu0 0
    %159 = vmatpush1.bf16.msra.mxu0 %v136
    %160 = vmatprep.subr.bf16.mxu0 0
    %161 = vmatpush1.bf16.msra.mxu0 %v137
    %162 = vmatprep.subr.bf16.mxu0 0
    %163 = vmatpush1.bf16.msra.mxu0 0
    %164 = vmatprep.subr.bf16.mxu0 0
    %165 = vmatpush1.bf16.msra.mxu0 0
    %166 = vmatprep.subr.bf16.mxu0 0
    %167 = vmatpush1.bf16.msra.mxu0 0
    %168 = vmatprep.subr.bf16.mxu0 0
    %169 = vmatpush1.bf16.msra.mxu0 0
    %170 = vmatprep.subr.bf16.mxu0 0
    %171 = vmatpush1.bf16.msra.mxu0 0
    %172 = vmatprep.subr.bf16.mxu0 0
    %173 = vmatpush1.bf16.msra.mxu0 0
    %174 = vmatprep.subr.bf16.mxu0 0
    %175 = vmatpush1.bf16.msra.mxu0 0
    %176 = vmatprep.subr.bf16.mxu0 0
    %177 = vmatpush1.bf16.msra.mxu0 0
    %178 = vmatprep.mubr.bf16.mxu0 0
    %179 = vmatmul.mubr.bf16.gmra.mrb[0].mxu0 %v96
    %v180 = vpop.f32.mrb[0].mxu0
    %v181 = vadd.f32 0.0, %v180
    %v182 = vpop.f32.mrb[0].mxu0
    %v183 = vpop.f32.mrb[0].mxu0
    %v184 = vadd.f32 0.0, %v183
    %v185 = vpop.f32.mrb[0].mxu0
    %186 = vdwg.mxu0
    %v187 = vld [vmem:[#allocation7] sm:$0xf]
    %v188 = vld [vmem:[#allocation7 + $0x4] sm:$0xf]
    %v189 = vld [vmem:[#allocation7 + $0x8] sm:$0xf]
    %v190 = vld [vmem:[#allocation7 + $0xc] sm:$0xf]
    %v191 = vld [vmem:[#allocation7 + $0x10] sm:$0xf]
    %v192 = vld [vmem:[#allocation7 + $0x14] sm:$0xf]
    %v193 = vld [vmem:[#allocation7 + $0x18] sm:$0xf]
    %v194 = vld [vmem:[#allocation7 + $0x1c] sm:$0xf]
    %v195 = vld [vmem:[#allocation7 + $0x20] sm:$0xf]
    %v196 = vld [vmem:[#allocation7 + $0x24] sm:$0xf]
    %v197 = vld [vmem:[#allocation7 + $0x28] sm:$0xf]
    %v198 = vld [vmem:[#allocation7 + $0x2c] sm:$0xf]
    %v199 = vld [vmem:[#allocation7 + $0x30] sm:$0xf]
    %v200 = vld [vmem:[#allocation7 + $0x34] sm:$0xf]
    %v201 = vld [vmem:[#allocation7 + $0x38] sm:$0xf]
    %v202 = vld [vmem:[#allocation7 + $0x3c] sm:$0xf]
    %v219 = vunpack.c.l.b16 %v187
    %v220 = vunpack.c.l.b16 %v188
    %v221 = vunpack.c.l.b16 %v189
    %v222 = vunpack.c.l.b16 %v190
    %v223 = vunpack.c.l.b16 %v191
    %v224 = vunpack.c.l.b16 %v192
    %v225 = vunpack.c.l.b16 %v193
    %v226 = vunpack.c.l.b16 %v194
    %v227 = vunpack.c.l.b16 %v195
    %v228 = vunpack.c.l.b16 %v196
    %v229 = vunpack.c.l.b16 %v197
    %v230 = vunpack.c.l.b16 %v198
    %v231 = vunpack.c.l.b16 %v199
    %v232 = vunpack.c.l.b16 %v200
    %v233 = vunpack.c.l.b16 %v201
    %v234 = vunpack.c.l.b16 %v202
    %v235 = vpack.c.b16 %v220, %v219
    %v236 = vpack.c.b16 %v222, %v221
    %v237 = vpack.c.b16 %v224, %v223
    %v238 = vpack.c.b16 %v226, %v225
    %v239 = vpack.c.b16 %v228, %v227
    %v240 = vpack.c.b16 %v230, %v229
    %v241 = vpack.c.b16 %v232, %v231
    %v242 = vpack.c.b16 %v234, %v233
    %251 = vmatprep.subr.bf16.mxu0 0
    %252 = vmatpush1.bf16.msra.mxu0 %v235
    %253 = vmatprep.subr.bf16.mxu0 0
    %254 = vmatpush1.bf16.msra.mxu0 %v236
    %255 = vmatprep.subr.bf16.mxu0 0
    %256 = vmatpush1.bf16.msra.mxu0 %v237
    %257 = vmatprep.subr.bf16.mxu0 0
    %258 = vmatpush1.bf16.msra.mxu0 %v238
    %259 = vmatprep.subr.bf16.mxu0 0
    %260 = vmatpush1.bf16.msra.mxu0 %v239
    %261 = vmatprep.subr.bf16.mxu0 0
    %262 = vmatpush1.bf16.msra.mxu0 %v240
    %263 = vmatprep.subr.bf16.mxu0 0
    %264 = vmatpush1.bf16.msra.mxu0 %v241
    %265 = vmatprep.subr.bf16.mxu0 0
    %266 = vmatpush1.bf16.msra.mxu0 %v242
    %267 = vmatprep.subr.bf16.mxu0 0
    %268 = vmatpush1.bf16.msra.mxu0 0
    %269 = vmatprep.subr.bf16.mxu0 0
    %270 = vmatpush1.bf16.msra.mxu0 0
    %271 = vmatprep.subr.bf16.mxu0 0
    %272 = vmatpush1.bf16.msra.mxu0 0
    %273 = vmatprep.subr.bf16.mxu0 0
    %274 = vmatpush1.bf16.msra.mxu0 0
    %275 = vmatprep.subr.bf16.mxu0 0
    %276 = vmatpush1.bf16.msra.mxu0 0
    %277 = vmatprep.subr.bf16.mxu0 0
    %278 = vmatpush1.bf16.msra.mxu0 0
    %279 = vmatprep.subr.bf16.mxu0 0
    %280 = vmatpush1.bf16.msra.mxu0 0
    %281 = vmatprep.subr.bf16.mxu0 0
    %282 = vmatpush1.bf16.msra.mxu0 0
    %283 = vmatprep.mubr.bf16.mxu0 0
    %284 = vmatmul.mubr.bf16.gmra.mrb[0].mxu0 %v96
    %v285 = vpop.f32.mrb[0].mxu0
    %v286 = vadd.f32 0.0, %v285
    %v287 = vpop.f32.mrb[0].mxu0
    %v288 = vpop.f32.mrb[0].mxu0
    %v289 = vadd.f32 0.0, %v288
    %v290 = vpop.f32.mrb[0].mxu0
    %291 = vdwg.mxu0
    %v292 = vxor.u32 %v181, 2147483648
    %v293 = vxor.u32 %v184, 2147483648
    %v294 = vmul.f32 %v292, 1.442695
    %v295 = vpow.pop %v294
    %v296 = vmul.f32 %v293, 1.442695
    %v297 = vpow.pop %v296
    %v298 = vadd.f32 %v295, 1.0
    %v299 = vadd.f32 %v297, 1.0
    %v300 = vrcp.pop %v298
    %v301 = vmul.f32 1.0, %v300
    %v302 = vrcp.pop %v299
    %v303 = vmul.f32 1.0, %v302
    %v304 = vmul.f32 %v181, %v301
    %v305 = vmul.f32 %v184, %v303
    %v306 = vmul.f32 %v304, %v286
    %v307 = vmul.f32 %v305, %v289
    %v308 = vpack.c.bf16 %v307, %v306
    %v309 = vld [vmem:[#allocation8] sm:$0xf]
    %v310 = vld [vmem:[#allocation8 + $0x4] sm:$0xf]
    %v311 = vld [vmem:[#allocation8 + $0x8] sm:$0xf]
    %v312 = vld [vmem:[#allocation8 + $0xc] sm:$0xf]
    %v313 = vld [vmem:[#allocation8 + $0x10] sm:$0xf]
    %v314 = vld [vmem:[#allocation8 + $0x14] sm:$0xf]
    %v315 = vld [vmem:[#allocation8 + $0x18] sm:$0xf]
    %v316 = vld [vmem:[#allocation8 + $0x1c] sm:$0xf]
    %v317 = vld [vmem:[#allocation8 + $0x20] sm:$0xf]
    %v318 = vld [vmem:[#allocation8 + $0x24] sm:$0xf]
    %v319 = vld [vmem:[#allocation8 + $0x28] sm:$0xf]
    %v320 = vld [vmem:[#allocation8 + $0x2c] sm:$0xf]
    %v321 = vld [vmem:[#allocation8 + $0x30] sm:$0xf]
    %v322 = vld [vmem:[#allocation8 + $0x34] sm:$0xf]
    %v323 = vld [vmem:[#allocation8 + $0x38] sm:$0xf]
    %v324 = vld [vmem:[#allocation8 + $0x3c] sm:$0xf]
    %v341 = vunpack.c.l.b16 %v309
    %v342 = vunpack.c.l.b16 %v310
    %v343 = vunpack.c.l.b16 %v311
    %v344 = vunpack.c.l.b16 %v312
    %v345 = vunpack.c.l.b16 %v313
    %v346 = vunpack.c.l.b16 %v314
    %v347 = vunpack.c.l.b16 %v315
    %v348 = vunpack.c.l.b16 %v316
    %v349 = vunpack.c.l.b16 %v317
    %v350 = vunpack.c.l.b16 %v318
    %v351 = vunpack.c.l.b16 %v319
    %v352 = vunpack.c.l.b16 %v320
    %v353 = vunpack.c.l.b16 %v321
    %v354 = vunpack.c.l.b16 %v322
    %v355 = vunpack.c.l.b16 %v323
    %v356 = vunpack.c.l.b16 %v324
    %v357 = vpack.c.b16 %v342, %v341
    %v358 = vpack.c.b16 %v344, %v343
    %v359 = vpack.c.b16 %v346, %v345
    %v360 = vpack.c.b16 %v348, %v347
    %v361 = vpack.c.b16 %v350, %v349
    %v362 = vpack.c.b16 %v352, %v351
    %v363 = vpack.c.b16 %v354, %v353
    %v364 = vpack.c.b16 %v356, %v355
    %373 = vmatprep.subr.bf16.mxu0 0
    %374 = vmatpush1.bf16.msra.mxu0 %v357
    %375 = vmatprep.subr.bf16.mxu0 0
    %376 = vmatpush1.bf16.msra.mxu0 %v358
    %377 = vmatprep.subr.bf16.mxu0 0
    %378 = vmatpush1.bf16.msra.mxu0 %v359
    %379 = vmatprep.subr.bf16.mxu0 0
    %380 = vmatpush1.bf16.msra.mxu0 %v360
    %381 = vmatprep.subr.bf16.mxu0 0
    %382 = vmatpush1.bf16.msra.mxu0 %v361
    %383 = vmatprep.subr.bf16.mxu0 0
    %384 = vmatpush1.bf16.msra.mxu0 %v362
    %385 = vmatprep.subr.bf16.mxu0 0
    %386 = vmatpush1.bf16.msra.mxu0 %v363
    %387 = vmatprep.subr.bf16.mxu0 0
    %388 = vmatpush1.bf16.msra.mxu0 %v364
    %389 = vmatprep.subr.bf16.mxu0 0
    %390 = vmatpush1.bf16.msra.mxu0 0
    %391 = vmatprep.subr.bf16.mxu0 0
    %392 = vmatpush1.bf16.msra.mxu0 0
    %393 = vmatprep.subr.bf16.mxu0 0
    %394 = vmatpush1.bf16.msra.mxu0 0
    %395 = vmatprep.subr.bf16.mxu0 0
    %396 = vmatpush1.bf16.msra.mxu0 0
    %397 = vmatprep.subr.bf16.mxu0 0
    %398 = vmatpush1.bf16.msra.mxu0 0
    %399 = vmatprep.subr.bf16.mxu0 0
    %400 = vmatpush1.bf16.msra.mxu0 0
    %401 = vmatprep.subr.bf16.mxu0 0
    %402 = vmatpush1.bf16.msra.mxu0 0
    %403 = vmatprep.subr.bf16.mxu0 0
    %404 = vmatpush1.bf16.msra.mxu0 0
    %405 = vmatprep.mubr.bf16.mxu0 0
    %406 = vmatmul.mubr.bf16.gmra.mrb[0].mxu0 %v308
    %v407 = vpop.f32.mrb[0].mxu0
    %v408 = vadd.f32 0.0, %v407
    %v409 = vpop.f32.mrb[0].mxu0
    %v410 = vpop.f32.mrb[0].mxu0
    %v411 = vadd.f32 0.0, %v410
    %v412 = vpop.f32.mrb[0].mxu0
    %413 = vdwg.mxu0
    %414 = vst [vmem:[#allocation10] sm:$0xff] %v408
    %415 = vst [vmem:[#allocation10 + $0x8] sm:$0xff] %v411
    // Predicated region
    $region34: #{tpu_custom_call.1} parent=1 // pred_check
      _
    $region35: #{tpu_custom_call.1} parent=1 // pred_check_branch
      %417 = sbr.rel (0) target = $region37
    $region36: #{tpu_custom_call.1} parent=1 // pred_region
      %s419 = ssub.s32 256, 256
      %420 = vsyncadd [#allocation4], %s419
      %s421 = sshll.u32 [#allocation10], 4
      %s422 = int_to_ptr.vmem [resolvable:$true] %s421
      %427 = dma.vmem_to_hbm [thread:$0]  %s422, 256, %s4, [#allocation4], 128, 128, 8
    $region37: #{tpu_custom_call.1} parent=1 // pred_fallthru
      _
    // Predicated region
    $region38: #{tpu_custom_call.1} parent=1 // pred_check
      _
    $region39: #{tpu_custom_call.1} parent=1 // pred_check_branch
      %429 = sbr.rel (0) target = $region41
    $region40: #{tpu_custom_call.1} parent=1 // pred_region
      %430 = dma.done [#allocation4], 256
    $region41: #{tpu_custom_call.1} parent=1 // pred_fallthru
      _
    %431 = vsyncpa [#allocation3], 1
    %432 = vsyncpa [#allocation6], 1
    %433 = vsyncpa [#allocation9], 1
    %434 = vsyncpa [#allocation4], 1

</llo_original>
